<compile_context>
chip_gen: v7x
topology: tpu7x:2x2x1
jax: 0.10.0
libtpu: 0.0.40
codegen_flags: <defaults>
</compile_context>

<pallas_src>
import math
import jax
import jax.numpy as jnp
from jax.experimental import pallas as pl
from jax.experimental.pallas import tpu as pltpu


def _round_up(x, m):
    return ((x + m - 1) // m) * m


def _sigmoid(x):
    return 1.0 / (1.0 + jnp.exp(-x))


def npi_layout(stateDim, programDim, hiddenDim, keyDim, argumentDim,
               lstmLayers):
    """Row/column layout of the packed parameter slab (all static ints)."""
    H = hiddenDim
    L = lstmLayers
    inputDim = stateDim + programDim
    max_in = max(inputDim, H)
    R = _round_up(max_in + H, 8)                    # rows per LSTM layer block
    head_out = 2 + keyDim + argumentDim
    COLS = _round_up(max(4 * H, 3 * H, head_out), 128)
    off_lstm_w = 0
    off_lstm_b = off_lstm_w + L * R
    off_w1 = off_lstm_b + _round_up(L, 8)
    off_b1 = off_w1 + _round_up(H, 8)
    off_w2 = off_b1 + 8
    off_b2 = off_w2 + COLS
    total_rows = _round_up(off_b2 + 8, 8)
    return dict(H=H, L=L, inputDim=inputDim, keyDim=keyDim,
                argumentDim=argumentDim, head_out=head_out, R=R, COLS=COLS,
                off_lstm_w=off_lstm_w, off_lstm_b=off_lstm_b, off_w1=off_w1,
                off_b1=off_b1, off_w2=off_w2, off_b2=off_b2,
                total_rows=total_rows)


def make_npi_kernel(layout):
    """Builds the Pallas kernel body for a fixed set of dimensions."""
    H = layout["H"]
    L = layout["L"]
    inputDim = layout["inputDim"]
    R = layout["R"]
    COLS = layout["COLS"]
    off_lstm_b = layout["off_lstm_b"]
    off_w1 = layout["off_w1"]
    off_b1 = layout["off_b1"]
    off_w2 = layout["off_w2"]
    off_b2 = layout["off_b2"]

    def kernel(hc_ref, x_ref, p_ref, hc_out_ref, heads_out_ref):
        x = x_ref[...].astype(jnp.float32)          # (1, inputDim)
        hc = hc_ref[...].astype(jnp.float32)        # (2L, H): rows 0..L-1 = h

        lane = jax.lax.broadcasted_iota(jnp.int32, (1, COLS), 1)
        g_mask = (lane >= 2 * H) & (lane < 3 * H)     # tanh segment of gates
        key_mask = (lane >= H) & (lane < 2 * H)       # ReLU segment of head-1

        layer_in = x
        for l in range(L):                            # unrolled, L is static
            in_l = inputDim if l == 0 else H
            w = p_ref[l * R: l * R + in_l + H, :]                 # (in_l+H, COLS)
            b = p_ref[off_lstm_b + l: off_lstm_b + l + 1, :]      # (1, COLS)
            h_prev = hc[l:l + 1, :]                               # (1, H)
            c_prev = hc[L + l:L + l + 1, :]                       # (1, H)

            cat = jnp.concatenate([layer_in, h_prev], axis=-1)    # (1, in_l+H)
            gates = jnp.dot(cat, w,
                            preferred_element_type=jnp.float32) + b  # (1, COLS)
            # dense activation over the full 128-lane gates vreg
            act = jnp.where(g_mask, jnp.tanh(gates), _sigmoid(gates))
            i_g = act[:, 0 * H:1 * H]
            f_g = act[:, 1 * H:2 * H]
            g_g = act[:, 2 * H:3 * H]
            o_g = act[:, 3 * H:4 * H]
            c_new = f_g * c_prev + i_g * g_g
            h_new = o_g * jnp.tanh(c_new)
            hc_out_ref[l:l + 1, :] = h_new
            hc_out_ref[L + l:L + l + 1, :] = c_new
            layer_in = h_new

        emb = jnp.maximum(layer_in, 0.0)              # relu(lstm output), (1,H)

        # fused head first linear: cols [0:H)=ter, [H:2H)=key, [2H:3H)=arg
        w1 = p_ref[off_w1:off_w1 + H, :]              # (H, COLS)
        b1 = p_ref[off_b1:off_b1 + 1, :]              # (1, COLS)
        hid1 = jnp.dot(emb, w1, preferred_element_type=jnp.float32) + b1
        hid1 = jnp.where(key_mask, jnp.maximum(hid1, 0.0), hid1)

        # fused head second linear: block-diagonal, padded to (COLS, COLS)
        w2 = p_ref[off_w2:off_w2 + COLS, :]           # (COLS, COLS)
        b2 = p_ref[off_b2:off_b2 + 1, :]              # (1, COLS)
        heads = jnp.dot(hid1, w2, preferred_element_type=jnp.float32) + b2
        heads_out_ref[...] = jnp.maximum(heads, 0.0)  # (1, COLS) dense store

    return kernel


class NPIPallas:
    """JAX/Pallas equivalent of the PyTorch `npi` module."""

    def __init__(self, stateDim, programDim, hiddenDim, keyDim, argumentDim,
                 lstmLayers, rng_key):
        self.stateDim = stateDim
        self.programDim = programDim
        self.hiddenDim = hiddenDim
        self.keyDim = keyDim
        self.argumentDim = argumentDim
        self.inputDim = stateDim + programDim
        self.lstmLayers = lstmLayers
        self.layout = npi_layout(stateDim, programDim, hiddenDim, keyDim,
                                 argumentDim, lstmLayers)

        H = hiddenDim
        k = 1.0 / math.sqrt(H)

        def uni(key, shape):
            return jax.random.uniform(key, shape, jnp.float32, -k, k)

        keys = iter(jax.random.split(rng_key, 8 * lstmLayers + 32))

        # LSTM parameters (PyTorch layout: (4H, in), gate order i,f,g,o).
        self.lstm_params = []
        for l in range(lstmLayers):
            in_dim = self.inputDim if l == 0 else H
            w_ih = uni(next(keys), (4 * H, in_dim))
            w_hh = uni(next(keys), (4 * H, H))
            b_ih = uni(next(keys), (1, 4 * H))
            b_hh = uni(next(keys), (1, 4 * H))
            self.lstm_params.append((w_ih, w_hh, b_ih, b_hh))

        def linear_params(out_dim, in_dim):
            w = uni(next(keys), (out_dim, in_dim))
            b = uni(next(keys), (1, out_dim))
            return w, b

        self.ter_params = linear_params(H, H) + linear_params(2, H)
        self.key_params = linear_params(H, H) + linear_params(keyDim, H)
        self.arg_params = linear_params(H, H) + linear_params(argumentDim, H)

        # Pack all parameters once into a single lane-dense slab.
        self.param_slab = self._build_param_slab()
        self._forward = jax.jit(self._make_forward())

    # ------------------------------------------------------------------ #

    def _build_param_slab(self):
        lay = self.layout
        H, L = self.hiddenDim, self.lstmLayers
        inputDim = self.inputDim
        COLS, R = lay["COLS"], lay["R"]
        kD, aD = self.keyDim, self.argumentDim

        slab = jnp.zeros((lay["total_rows"], COLS), jnp.float32)

        # LSTM: per-layer fused [W_ih.T ; W_hh.T] and fused bias b_ih+b_hh.
        for l, (w_ih, w_hh, b_ih, b_hh) in enumerate(self.lstm_params):
            in_l = inputDim if l == 0 else H
            base = l * R
            slab = slab.at[base:base + in_l, :4 * H].set(w_ih.T)
            slab = slab.at[base + in_l:base + in_l + H, :4 * H].set(w_hh.T)
            slab = slab.at[lay["off_lstm_b"] + l, :4 * H].set((b_ih + b_hh)[0])

        wt1, bt1, wt2, bt2 = self.ter_params
        wk1, bk1, wk2, bk2 = self.key_params
        wa1, ba1, wa2, ba2 = self.arg_params
        ow1, ob1 = lay["off_w1"], lay["off_b1"]
        ow2, ob2 = lay["off_w2"], lay["off_b2"]

        # Fused head first linear: (H, 3H) columns = [ter | key | arg].
        slab = slab.at[ow1:ow1 + H, 0:H].set(wt1.T)
        slab = slab.at[ow1:ow1 + H, H:2 * H].set(wk1.T)
        slab = slab.at[ow1:ow1 + H, 2 * H:3 * H].set(wa1.T)
        slab = slab.at[ob1, 0:H].set(bt1[0])
        slab = slab.at[ob1, H:2 * H].set(bk1[0])
        slab = slab.at[ob1, 2 * H:3 * H].set(ba1[0])

        # Fused head second linear: block-diagonal (3H, 2+keyDim+argDim),
        # zero-padded to (COLS, COLS) so the output store is 128-lane dense.
        slab = slab.at[ow2:ow2 + H, 0:2].set(wt2.T)
        slab = slab.at[ow2 + H:ow2 + 2 * H, 2:2 + kD].set(wk2.T)
        slab = slab.at[ow2 + 2 * H:ow2 + 3 * H, 2 + kD:2 + kD + aD].set(wa2.T)
        slab = slab.at[ob2, 0:2].set(bt2[0])
        slab = slab.at[ob2, 2:2 + kD].set(bk2[0])
        slab = slab.at[ob2, 2 + kD:2 + kD + aD].set(ba2[0])
        return slab

    def _make_forward(self):
        L, H = self.lstmLayers, self.hiddenDim
        keyDim, argDim = self.keyDim, self.argumentDim
        COLS = self.layout["COLS"]
        kernel = make_npi_kernel(self.layout)

        vmem = pl.BlockSpec(memory_space=pltpu.MemorySpace.VMEM)
        call = pl.pallas_call(
            kernel,
            out_shape=(
                jax.ShapeDtypeStruct((2 * L, H), jnp.float32),   # [h ; c]
                jax.ShapeDtypeStruct((1, COLS), jnp.float32),    # packed heads
            ),
            in_specs=[vmem, vmem, vmem],
            out_specs=(vmem, vmem),
        )

        def forward(stateEncoding, programEmbedding, h0, c0, param_slab):
            spIn = jnp.concatenate([stateEncoding, programEmbedding],
                                   axis=-1).astype(jnp.float32)  # (1, inputDim)
            hc0 = jnp.concatenate([h0.reshape(L, H), c0.reshape(L, H)],
                                  axis=0).astype(jnp.float32)    # (2L, H)
            hc_new, heads = call(hc0, spIn, param_slab)
            h_new = hc_new[:L].reshape(L, 1, H)
            c_new = hc_new[L:].reshape(L, 1, H)
            ter = heads[:, 0:2]
            key = heads[:, 2:2 + keyDim]
            arg = heads[:, 2 + keyDim:2 + keyDim + argDim]
            return (h_new, c_new), ter, key, arg

        return forward

    def __call__(self, stateEncoding, programEmbedding, hidden):
        h0, c0 = hidden                               # (L, 1, H) each
        return self._forward(stateEncoding, programEmbedding, h0, c0,
                             self.param_slab)

    # Pure-JAX reference (same math, no Pallas) for verification.
    def reference(self, stateEncoding, programEmbedding, hidden):
        L, H = self.lstmLayers, self.hiddenDim
        h0, c0 = hidden
        x = jnp.concatenate([stateEncoding, programEmbedding],
                            axis=-1).astype(jnp.float32)
        layer_in = x
        h_news, c_news = [], []
        for l in range(L):
            w_ih, w_hh, b_ih, b_hh = self.lstm_params[l]
            h_prev = h0[l]
            c_prev = c0[l]
            gates = layer_in @ w_ih.T + h_prev @ w_hh.T + b_ih + b_hh
            i_g = _sigmoid(gates[:, 0 * H:1 * H])
            f_g = _sigmoid(gates[:, 1 * H:2 * H])
            g_g = jnp.tanh(gates[:, 2 * H:3 * H])
            o_g = _sigmoid(gates[:, 3 * H:4 * H])
            c_new = f_g * c_prev + i_g * g_g
            h_new = o_g * jnp.tanh(c_new)
            h_news.append(h_new[None])
            c_news.append(c_new[None])
            layer_in = h_new
        emb = jax.nn.relu(layer_in)
        wt1, bt1, wt2, bt2 = self.ter_params
        ter = jax.nn.relu((emb @ wt1.T + bt1) @ wt2.T + bt2)
        wk1, bk1, wk2, bk2 = self.key_params
        key = jax.nn.relu(jax.nn.relu(emb @ wk1.T + bk1) @ wk2.T + bk2)
        wa1, ba1, wa2, ba2 = self.arg_params
        arg = jax.nn.relu((emb @ wa1.T + ba1) @ wa2.T + ba2)
        return ((jnp.concatenate(h_news, 0), jnp.concatenate(c_news, 0)),
                ter, key, arg)


if __name__ == "__main__":
    stateDim, programDim = 16, 16
    hiddenDim, keyDim, argumentDim, lstmLayers = 32, 16, 8, 2

    root = jax.random.PRNGKey(0)
    k_param, k_state, k_prog, k_h, k_c = jax.random.split(root, 5)

    model = NPIPallas(stateDim, programDim, hiddenDim, keyDim, argumentDim,
                      lstmLayers, k_param)

    stateEncoding = jax.random.normal(k_state, (1, stateDim), jnp.float32)
    programEmbedding = jax.random.normal(k_prog, (1, programDim), jnp.float32)
    h0 = jax.random.normal(k_h, (lstmLayers, 1, hiddenDim), jnp.float32)
    c0 = jax.random.normal(k_c, (lstmLayers, 1, hiddenDim), jnp.float32)

    hidden_new, ter, key_o, arg_o = model(stateEncoding, programEmbedding,
                                          (h0, c0))
    jax.block_until_ready((hidden_new, ter, key_o, arg_o))

    # Verify against pure-JAX reference.
    (ref_hidden, ref_ter, ref_key, ref_arg) = model.reference(
        stateEncoding, programEmbedding, (h0, c0))
    import numpy as np
    np.testing.assert_allclose(hidden_new[0], ref_hidden[0], rtol=1e-5, atol=1e-5)
    np.testing.assert_allclose(hidden_new[1], ref_hidden[1], rtol=1e-5, atol=1e-5)
    np.testing.assert_allclose(ter, ref_ter, rtol=1e-5, atol=1e-5)
    np.testing.assert_allclose(key_o, ref_key, rtol=1e-5, atol=1e-5)
    np.testing.assert_allclose(arg_o, ref_arg, rtol=1e-5, atol=1e-5)

    assert hidden_new[0].shape == (lstmLayers, 1, hiddenDim)
    assert hidden_new[1].shape == (lstmLayers, 1, hiddenDim)
    assert ter.shape == (1, 2)
    assert key_o.shape == (1, keyDim)
    assert arg_o.shape == (1, argumentDim)

    print("KERNEL_OK")
</pallas_src>

<mosaic_0001>
module attributes {stable_mosaic.version = 11 : i64} {
  func.func @kernel(%arg0: memref<4x32xf32, #tpu.memory_space<vmem>>, %arg1: memref<1x32xf32, #tpu.memory_space<vmem>>, %arg2: memref<312x128xf32, #tpu.memory_space<vmem>>, %arg3: memref<4x32xf32, #tpu.memory_space<vmem>>, %arg4: memref<1x128xf32, #tpu.memory_space<vmem>>) attributes {dimension_semantics = [], scalar_prefetch = 0 : i64, scratch_operands = 0 : i64, tpu.core_type = #tpu.core_type<tc>} {
    %c0 = arith.constant 0 : index
    %c0_0 = arith.constant 0 : index
    %0 = vector.load %arg1[%c0, %c0_0] : memref<1x32xf32, #tpu.memory_space<vmem>>, vector<1x32xf32>
    %c0_1 = arith.constant 0 : index
    %c0_2 = arith.constant 0 : index
    %1 = vector.load %arg0[%c0_1, %c0_2] : memref<4x32xf32, #tpu.memory_space<vmem>>, vector<4x32xf32>
    %2 = tpu.iota {dimensions = array<i32: 1>} : vector<1x128xi32>
    %c64_i32 = arith.constant 64 : i32
    %3 = vector.broadcast %c64_i32 : i32 to vector<1x128xi32>
    %4 = arith.cmpi sge, %2, %3 : vector<1x128xi32>
    %c96_i32 = arith.constant 96 : i32
    %5 = vector.broadcast %c96_i32 : i32 to vector<1x128xi32>
    %6 = arith.cmpi slt, %2, %5 : vector<1x128xi32>
    %7 = arith.andi %4, %6 : vector<1x128xi1>
    %c32_i32 = arith.constant 32 : i32
    %8 = vector.broadcast %c32_i32 : i32 to vector<1x128xi32>
    %9 = arith.cmpi sge, %2, %8 : vector<1x128xi32>
    %c64_i32_3 = arith.constant 64 : i32
    %10 = vector.broadcast %c64_i32_3 : i32 to vector<1x128xi32>
    %11 = arith.cmpi slt, %2, %10 : vector<1x128xi32>
    %12 = arith.andi %9, %11 : vector<1x128xi1>
    %c0_4 = arith.constant 0 : index
    %c0_5 = arith.constant 0 : index
    %13 = vector.load %arg2[%c0_4, %c0_5] : memref<312x128xf32, #tpu.memory_space<vmem>>, vector<64x128xf32>
    %c128 = arith.constant 128 : index
    %c0_6 = arith.constant 0 : index
    %14 = vector.load %arg2[%c128, %c0_6] : memref<312x128xf32, #tpu.memory_space<vmem>>, vector<1x128xf32>
    %15 = vector.extract_strided_slice %1 {offsets = [0, 0], sizes = [1, 32], strides = [1, 1]} : vector<4x32xf32> to vector<1x32xf32>
    %16 = vector.extract_strided_slice %1 {offsets = [2, 0], sizes = [1, 32], strides = [1, 1]} : vector<4x32xf32> to vector<1x32xf32>
    %17 = tpu.concatenate %0, %15 in 1 : vector<1x32xf32>, vector<1x32xf32> -> vector<1x64xf32>
    %cst = arith.constant dense<0.000000e+00> : vector<1x128xf32>
    %18 = tpu.matmul %17, %13, %cst {dimension_numbers = #tpu.dot_dimension_numbers<[1], [0], [0], [1], [0, 0, 1, 1], [], []>} : vector<1x64xf32>, vector<64x128xf32>, vector<1x128xf32> -> vector<1x128xf32>
    %19 = arith.addf %18, %14 : vector<1x128xf32>
    %20 = math.tanh %19 : vector<1x128xf32>
    %cst_7 = arith.constant 0.000000e+00 : f32
    %21 = vector.broadcast %cst_7 : f32 to vector<1x128xf32>
    %22 = arith.subf %21, %19 : vector<1x128xf32>
    %23 = math.exp %22 : vector<1x128xf32>
    %cst_8 = arith.constant 1.000000e+00 : f32
    %24 = vector.broadcast %cst_8 : f32 to vector<1x128xf32>
    %25 = arith.addf %24, %23 : vector<1x128xf32>
    %cst_9 = arith.constant 1.000000e+00 : f32
    %26 = vector.broadcast %cst_9 : f32 to vector<1x128xf32>
    %27 = arith.divf %26, %25 : vector<1x128xf32>
    %28 = arith.select %7, %20, %27 : vector<1x128xi1>, vector<1x128xf32>
    %29 = vector.extract_strided_slice %28 {offsets = [0, 0], sizes = [1, 32], strides = [1, 1]} : vector<1x128xf32> to vector<1x32xf32>
    %30 = vector.extract_strided_slice %28 {offsets = [0, 32], sizes = [1, 32], strides = [1, 1]} : vector<1x128xf32> to vector<1x32xf32>
    %31 = vector.extract_strided_slice %28 {offsets = [0, 64], sizes = [1, 32], strides = [1, 1]} : vector<1x128xf32> to vector<1x32xf32>
    %32 = vector.extract_strided_slice %28 {offsets = [0, 96], sizes = [1, 32], strides = [1, 1]} : vector<1x128xf32> to vector<1x32xf32>
    %33 = arith.mulf %30, %16 : vector<1x32xf32>
    %34 = arith.mulf %29, %31 : vector<1x32xf32>
    %35 = arith.addf %33, %34 : vector<1x32xf32>
    %36 = math.tanh %35 : vector<1x32xf32>
    %37 = arith.mulf %32, %36 : vector<1x32xf32>
    %c0_10 = arith.constant 0 : index
    %c0_11 = arith.constant 0 : index
    %38 = vector.load %arg3[%c0_10, %c0_11] : memref<4x32xf32, #tpu.memory_space<vmem>>, vector<1x32xf32>
    tpu.vector_store %arg3[%c0_10, %c0_11], %37 {strides = array<i32>} : memref<4x32xf32, #tpu.memory_space<vmem>>, vector<1x32xf32>,
    %c2 = arith.constant 2 : index
    %c0_12 = arith.constant 0 : index
    %39 = vector.load %arg3[%c2, %c0_12] : memref<4x32xf32, #tpu.memory_space<vmem>>, vector<1x32xf32>
    tpu.vector_store %arg3[%c2, %c0_12], %35 {strides = array<i32>} : memref<4x32xf32, #tpu.memory_space<vmem>>, vector<1x32xf32>,
    %c64 = arith.constant 64 : index
    %c0_13 = arith.constant 0 : index
    %40 = vector.load %arg2[%c64, %c0_13] : memref<312x128xf32, #tpu.memory_space<vmem>>, vector<64x128xf32>
    %c129 = arith.constant 129 : index
    %c0_14 = arith.constant 0 : index
    %41 = vector.load %arg2[%c129, %c0_14] : memref<312x128xf32, #tpu.memory_space<vmem>>, vector<1x128xf32>
    %42 = vector.extract_strided_slice %1 {offsets = [1, 0], sizes = [1, 32], strides = [1, 1]} : vector<4x32xf32> to vector<1x32xf32>
    %43 = vector.extract_strided_slice %1 {offsets = [3, 0], sizes = [1, 32], strides = [1, 1]} : vector<4x32xf32> to vector<1x32xf32>
    %44 = tpu.concatenate %37, %42 in 1 : vector<1x32xf32>, vector<1x32xf32> -> vector<1x64xf32>
    %cst_15 = arith.constant dense<0.000000e+00> : vector<1x128xf32>
    %45 = tpu.matmul %44, %40, %cst_15 {dimension_numbers = #tpu.dot_dimension_numbers<[1], [0], [0], [1], [0, 0, 1, 1], [], []>} : vector<1x64xf32>, vector<64x128xf32>, vector<1x128xf32> -> vector<1x128xf32>
    %46 = arith.addf %45, %41 : vector<1x128xf32>
    %47 = math.tanh %46 : vector<1x128xf32>
    %cst_16 = arith.constant 0.000000e+00 : f32
    %48 = vector.broadcast %cst_16 : f32 to vector<1x128xf32>
    %49 = arith.subf %48, %46 : vector<1x128xf32>
    %50 = math.exp %49 : vector<1x128xf32>
    %cst_17 = arith.constant 1.000000e+00 : f32
    %51 = vector.broadcast %cst_17 : f32 to vector<1x128xf32>
    %52 = arith.addf %51, %50 : vector<1x128xf32>
    %cst_18 = arith.constant 1.000000e+00 : f32
    %53 = vector.broadcast %cst_18 : f32 to vector<1x128xf32>
    %54 = arith.divf %53, %52 : vector<1x128xf32>
    %55 = arith.select %7, %47, %54 : vector<1x128xi1>, vector<1x128xf32>
    %56 = vector.extract_strided_slice %55 {offsets = [0, 0], sizes = [1, 32], strides = [1, 1]} : vector<1x128xf32> to vector<1x32xf32>
    %57 = vector.extract_strided_slice %55 {offsets = [0, 32], sizes = [1, 32], strides = [1, 1]} : vector<1x128xf32> to vector<1x32xf32>
    %58 = vector.extract_strided_slice %55 {offsets = [0, 64], sizes = [1, 32], strides = [1, 1]} : vector<1x128xf32> to vector<1x32xf32>
    %59 = vector.extract_strided_slice %55 {offsets = [0, 96], sizes = [1, 32], strides = [1, 1]} : vector<1x128xf32> to vector<1x32xf32>
    %60 = arith.mulf %57, %43 : vector<1x32xf32>
    %61 = arith.mulf %56, %58 : vector<1x32xf32>
    %62 = arith.addf %60, %61 : vector<1x32xf32>
    %63 = math.tanh %62 : vector<1x32xf32>
    %64 = arith.mulf %59, %63 : vector<1x32xf32>
    %c1 = arith.constant 1 : index
    %c0_19 = arith.constant 0 : index
    %65 = vector.load %arg3[%c1, %c0_19] : memref<4x32xf32, #tpu.memory_space<vmem>>, vector<1x32xf32>
    tpu.vector_store %arg3[%c1, %c0_19], %64 {strides = array<i32>} : memref<4x32xf32, #tpu.memory_space<vmem>>, vector<1x32xf32>,
    %c3 = arith.constant 3 : index
    %c0_20 = arith.constant 0 : index
    %66 = vector.load %arg3[%c3, %c0_20] : memref<4x32xf32, #tpu.memory_space<vmem>>, vector<1x32xf32>
    tpu.vector_store %arg3[%c3, %c0_20], %62 {strides = array<i32>} : memref<4x32xf32, #tpu.memory_space<vmem>>, vector<1x32xf32>,
    %cst_21 = arith.constant 0.000000e+00 : f32
    %67 = vector.broadcast %cst_21 : f32 to vector<1x32xf32>
    %68 = arith.maximumf %64, %67 : vector<1x32xf32>
    %c136 = arith.constant 136 : index
    %c0_22 = arith.constant 0 : index
    %69 = vector.load %arg2[%c136, %c0_22] : memref<312x128xf32, #tpu.memory_space<vmem>>, vector<32x128xf32>
    %c168 = arith.constant 168 : index
    %c0_23 = arith.constant 0 : index
    %70 = vector.load %arg2[%c168, %c0_23] : memref<312x128xf32, #tpu.memory_space<vmem>>, vector<1x128xf32>
    %cst_24 = arith.constant dense<0.000000e+00> : vector<1x128xf32>
    %71 = tpu.matmul %68, %69, %cst_24 {dimension_numbers = #tpu.dot_dimension_numbers<[1], [0], [0], [1], [0, 0, 1, 1], [], []>} : vector<1x32xf32>, vector<32x128xf32>, vector<1x128xf32> -> vector<1x128xf32>
    %72 = arith.addf %71, %70 : vector<1x128xf32>
    %cst_25 = arith.constant 0.000000e+00 : f32
    %73 = vector.broadcast %cst_25 : f32 to vector<1x128xf32>
    %74 = arith.maximumf %72, %73 : vector<1x128xf32>
    %75 = arith.select %12, %74, %72 : vector<1x128xi1>, vector<1x128xf32>
    %c176 = arith.constant 176 : index
    %c0_26 = arith.constant 0 : index
    %76 = vector.load %arg2[%c176, %c0_26] : memref<312x128xf32, #tpu.memory_space<vmem>>, vector<128x128xf32>
    %c304 = arith.constant 304 : index
    %c0_27 = arith.constant 0 : index
    %77 = vector.load %arg2[%c304, %c0_27] : memref<312x128xf32, #tpu.memory_space<vmem>>, vector<1x128xf32>
    %cst_28 = arith.constant dense<0.000000e+00> : vector<1x128xf32>
    %78 = tpu.matmul %75, %76, %cst_28 {dimension_numbers = #tpu.dot_dimension_numbers<[1], [0], [0], [1], [0, 0, 1, 1], [], []>} : vector<1x128xf32>, vector<128x128xf32>, vector<1x128xf32> -> vector<1x128xf32>
    %79 = arith.addf %78, %77 : vector<1x128xf32>
    %cst_29 = arith.constant 0.000000e+00 : f32
    %80 = vector.broadcast %cst_29 : f32 to vector<1x128xf32>
    %81 = arith.maximumf %79, %80 : vector<1x128xf32>
    %c0_30 = arith.constant 0 : index
    %c0_31 = arith.constant 0 : index
    %82 = vector.load %arg4[%c0_30, %c0_31] : memref<1x128xf32, #tpu.memory_space<vmem>>, vector<1x128xf32>
    tpu.vector_store %arg4[%c0_30, %c0_31], %81 {strides = array<i32>} : memref<1x128xf32, #tpu.memory_space<vmem>>, vector<1x128xf32>,
    return
  }
}

</mosaic_0001>

<llo_original>
// kernel: forward.1
$region0: #{forward.1}
  #allocation0 [shape = 'u32[]', space=smem, size = 0x4, offset = 0x4, fixed_abs, tag = 'smem constant byte address 0x4 - core index']
  #allocation1 [shape = 'u32[144,128]{1,0:T(1,128)}', space=vmem, size = 0x12000, scoped, tag = 'internal scratch']
  %s0 = inlined_call_operand.vmem [shape: f32[4,32], index: 0, kind: input, shape index: {}]
  %s1 = inlined_call_operand.vmem [shape: f32[1,32], index: 1, kind: input, shape index: {}]
  %s2 = inlined_call_operand.hbm [shape: f32[312,128], index: 2, kind: input, shape index: {}]
  %s3 = inlined_call_operand.vmem [shape: f32[4,32], index: 3, kind: output, shape index: {0}]
  %s4 = inlined_call_operand.vmem [shape: f32[1,128], index: 4, kind: output, shape index: {1}]
  %5 = xla_tuple %s3, %s4
  %s6 = sld [smem:[#allocation0]]
  $region34: #{forward.1} parent=0
    _
  %s8 = ssub.s32 1, %s6
  %s9 = scalar_select 0, %s8, %s6
  $region1: #{forward.1} parent=0
    #allocation2 [shape = 'u8[159744]{0}', space=vmem, size = 0x27000, scoped, tag = 'input window, operand 2, single buffered']
    #allocation3 [shape = 's32[1]{0}', space=sflag, size = 0x4, scoped, tag = 'scoped memory for forward.1']
    %10 = vsyncpa [#allocation3], 0
    // Predicated region
    $region2: #{forward.1} parent=1 // pred_check
      _
    $region3: #{forward.1} parent=1 // pred_check_branch
      %12 = sbr.rel (0) target = $region5
    $region4: #{forward.1} parent=1 // pred_region
      _
    $region5: #{forward.1} parent=1 // pred_fallthru
      _
    // Predicated region
    $region6: #{forward.1} parent=1 // pred_check
      _
    $region7: #{forward.1} parent=1 // pred_check_branch
      %14 = sbr.rel (0) target = $region9
    $region8: #{forward.1} parent=1 // pred_region
      _
    $region9: #{forward.1} parent=1 // pred_fallthru
      _
    // Predicated region
    $region10: #{forward.1} parent=1 // pred_check
      _
    $region11: #{forward.1} parent=1 // pred_check_branch
      %16 = sbr.rel (0) target = $region13
    $region12: #{forward.1} parent=1 // pred_region
      %s18 = ssub.s32 4992, 4992
      %19 = vsyncadd [#allocation3], %s18
      %s20 = sshll.u32 [#allocation2], 4
      %s21 = int_to_ptr.vmem [resolvable:$true] %s20
      %26 = dma.hbm_to_vmem [thread:$0]  %s2, 4992, %s21, [#allocation3], 128, 128, 8
    $region13: #{forward.1} parent=1 // pred_fallthru
      _
    // Predicated region
    $region14: #{forward.1} parent=1 // pred_check
      _
    $region15: #{forward.1} parent=1 // pred_check_branch
      %28 = sbr.rel (0) target = $region17
    $region16: #{forward.1} parent=1 // pred_region
      %29 = dma.done [#allocation3], 4992
    $region17: #{forward.1} parent=1 // pred_fallthru
      _
    %v30 = vld [vmem:[%s1] sm:$0x1]
    %v31 = vld [vmem:[%s0] sm:$0xf]
    %v32 = vlaneseq
    %v33 = vand.u32 %v32, 127
    %vm34 = vcmp.ge.s32.totalorder %v33, 64
    %vm35 = vcmp.lt.s32.totalorder %v33, 96
    %vm36 = vmand %vm34, %vm35
    %vm37 = vcmp.ge.s32.totalorder %v33, 32
    %vm38 = vcmp.lt.s32.totalorder %v33, 64
    %vm39 = vmand %vm37, %vm38
    %v40 = vld [vmem:[#allocation2] sm:$0xff]
    %v41 = vld [vmem:[#allocation2 + $0x8] sm:$0xff]
    %v42 = vld [vmem:[#allocation2 + $0x10] sm:$0xff]
    %v43 = vld [vmem:[#allocation2 + $0x18] sm:$0xff]
    %v44 = vld [vmem:[#allocation2 + $0x20] sm:$0xff]
    %v45 = vld [vmem:[#allocation2 + $0x28] sm:$0xff]
    %v46 = vld [vmem:[#allocation2 + $0x30] sm:$0xff]
    %v47 = vld [vmem:[#allocation2 + $0x38] sm:$0xff]
    %v48 = vld [vmem:[#allocation2 + $0x80] sm:$0x1]
    %50 = vrot.lane.b32.xlu0 %v31, 32
    %v51 = vpop.permute.xlu0 %50
    %vm53 = vcmask 261120
    %v54 = vsel %vm53, %v30, %v51
    %vm55 = vcmask 523264
    %v57 = vsel %vm55, %v54, 0
    %59 = vmatprep.subr.mxu0 0.0
    %60 = vmatpush1.msra.mxu0 %v40
    %61 = vmatprep.subr.mxu0 0.0
    %62 = vmatpush1.msra.mxu0 %v41
    %63 = vmatprep.subr.mxu0 0.0
    %64 = vmatpush1.msra.mxu0 %v42
    %65 = vmatprep.subr.mxu0 0.0
    %66 = vmatpush1.msra.mxu0 %v43
    %67 = vmatprep.subr.mxu0 0.0
    %68 = vmatpush1.msra.mxu0 %v44
    %69 = vmatprep.subr.mxu0 0.0
    %70 = vmatpush1.msra.mxu0 %v45
    %71 = vmatprep.subr.mxu0 0.0
    %72 = vmatpush1.msra.mxu0 %v46
    %73 = vmatprep.subr.mxu0 0.0
    %74 = vmatpush1.msra.mxu0 %v47
    %75 = vmatprep.subr.mxu0 0.0
    %76 = vmatpush1.msra.mxu0 0.0
    %77 = vmatprep.subr.mxu0 0.0
    %78 = vmatpush1.msra.mxu0 0.0
    %79 = vmatprep.subr.mxu0 0.0
    %80 = vmatpush1.msra.mxu0 0.0
    %81 = vmatprep.subr.mxu0 0.0
    %82 = vmatpush1.msra.mxu0 0.0
    %83 = vmatprep.subr.mxu0 0.0
    %84 = vmatpush1.msra.mxu0 0.0
    %85 = vmatprep.subr.mxu0 0.0
    %86 = vmatpush1.msra.mxu0 0.0
    %87 = vmatprep.subr.mxu0 0.0
    %88 = vmatpush1.msra.mxu0 0.0
    %89 = vmatprep.subr.mxu0 0.0
    %90 = vmatpush1.msra.mxu0 0.0
    %91 = vmatprep.subr.mxu0 0.0
    %92 = vmatpush1.msra.mxu0 0.0
    %93 = vmatprep.subr.mxu0 0.0
    %94 = vmatpush1.msra.mxu0 0.0
    %95 = vmatprep.subr.mxu0 0.0
    %96 = vmatpush1.msra.mxu0 0.0
    %97 = vmatprep.subr.mxu0 0.0
    %98 = vmatpush1.msra.mxu0 0.0
    %99 = vmatprep.subr.mxu0 0.0
    %100 = vmatpush1.msra.mxu0 0.0
    %101 = vmatprep.subr.mxu0 0.0
    %102 = vmatpush1.msra.mxu0 0.0
    %103 = vmatprep.subr.mxu0 0.0
    %104 = vmatpush1.msra.mxu0 0.0
    %105 = vmatprep.subr.mxu0 0.0
    %106 = vmatpush1.msra.mxu0 0.0
    %107 = vmatprep.subr.mxu0 0.0
    %108 = vmatpush1.msra.mxu0 0.0
    %109 = vmatprep.subr.mxu0 0.0
    %110 = vmatpush1.msra.mxu0 0.0
    %111 = vmatprep.subr.mxu0 0.0
    %112 = vmatpush1.msra.mxu0 0.0
    %113 = vmatprep.subr.mxu0 0.0
    %114 = vmatpush1.msra.mxu0 0.0
    %115 = vmatprep.subr.mxu0 0.0
    %116 = vmatpush1.msra.mxu0 0.0
    %117 = vmatprep.subr.mxu0 0.0
    %118 = vmatpush1.msra.mxu0 0.0
    %119 = vmatprep.subr.mxu0 0.0
    %120 = vmatpush1.msra.mxu0 0.0
    %121 = vmatprep.subr.mxu0 0.0
    %122 = vmatpush1.msra.mxu0 0.0
    %123 = vmatprep.mubr.f32.mxu0 0.0
    %124 = vmatmul.mubr.f32.gmra.mrb[0].mxu0 %v57
    %v125 = vpop.f32.mrb[0].mxu0
    %v126 = vadd.f32 %v48, %v125
    %v127 = vpop.f32.mrb[0].mxu0
    %128 = vdwg.mxu0
    %v129 = vtanh.pop %v126
    %v130 = vsub.f32 0.0, %v126
    %v131 = vmul.f32 %v130, 1.442695
    %v132 = vpow.pop %v131
    %v133 = vadd.f32 %v132, 1.0
    %v134 = vrcp.pop %v133
    %v135 = vmul.f32 1.0, %v134
    %v136 = vsel %vm36, %v129, %v135
    %v137 = vrot.slane %v31, 2
    %138 = vrot.lane.b32.xlu0 %v137, 32
    %v139 = vpop.permute.xlu0 %138
    %v141 = vmul.f32 %v136, %v139
    %143 = vrot.lane.b32.xlu0 %v136, 64
    %v144 = vpop.permute.xlu0 %143
    %v146 = vmul.f32 %v136, %v144
    %148 = vrot.lane.b32.xlu0 %v146, 32
    %v149 = vpop.permute.xlu0 %148
    %v151 = vadd.f32 %v141, %v149
    %v152 = vtanh.pop %v151
    %154 = vrot.lane.b32.xlu0 %v152, 64
    %v155 = vpop.permute.xlu0 %154
    %v157 = vmul.f32 %v136, %v155
    %159 = vrot.lane.b32.xlu0 %v157, 32
    %v160 = vpop.permute.xlu0 %159
    %vm162 = vcmask 253952
    %163 = vst.msk [vmem:[%s3] sm:$0x1] %vm162, %v160
    %165 = vrot.lane.b32.xlu0 %v151, 96
    %v166 = vpop.permute.xlu0 %165
    %168 = vst.msk [vmem:[%s3 + $0x2] sm:$0x1] %vm162, %v166
    %v169 = vld [vmem:[#allocation2 + $0x40] sm:$0xff]
    %v170 = vld [vmem:[#allocation2 + $0x48] sm:$0xff]
    %v171 = vld [vmem:[#allocation2 + $0x50] sm:$0xff]
    %v172 = vld [vmem:[#allocation2 + $0x58] sm:$0xff]
    %v173 = vld [vmem:[#allocation2 + $0x60] sm:$0xff]
    %v174 = vld [vmem:[#allocation2 + $0x68] sm:$0xff]
    %v175 = vld [vmem:[#allocation2 + $0x70] sm:$0xff]
    %v176 = vld [vmem:[#allocation2 + $0x78] sm:$0xff]
    %v177 = vld [vmem:[#allocation2 + $0x81] sm:$0x1]
    %v178 = vrot.slane %v31, 1
    %179 = vrot.lane.b32.xlu0 %v178, 32
    %v180 = vpop.permute.xlu0 %179
    %v182 = vsel %vm53, %v160, %v180
    %v184 = vsel %vm55, %v182, 0
    %186 = vmatprep.subr.mxu0 0.0
    %187 = vmatpush1.msra.mxu0 %v169
    %188 = vmatprep.subr.mxu0 0.0
    %189 = vmatpush1.msra.mxu0 %v170
    %190 = vmatprep.subr.mxu0 0.0
    %191 = vmatpush1.msra.mxu0 %v171
    %192 = vmatprep.subr.mxu0 0.0
    %193 = vmatpush1.msra.mxu0 %v172
    %194 = vmatprep.subr.mxu0 0.0
    %195 = vmatpush1.msra.mxu0 %v173
    %196 = vmatprep.subr.mxu0 0.0
    %197 = vmatpush1.msra.mxu0 %v174
    %198 = vmatprep.subr.mxu0 0.0
    %199 = vmatpush1.msra.mxu0 %v175
    %200 = vmatprep.subr.mxu0 0.0
    %201 = vmatpush1.msra.mxu0 %v176
    %202 = vmatprep.subr.mxu0 0.0
    %203 = vmatpush1.msra.mxu0 0.0
    %204 = vmatprep.subr.mxu0 0.0
    %205 = vmatpush1.msra.mxu0 0.0
    %206 = vmatprep.subr.mxu0 0.0
    %207 = vmatpush1.msra.mxu0 0.0
    %208 = vmatprep.subr.mxu0 0.0
    %209 = vmatpush1.msra.mxu0 0.0
    %210 = vmatprep.subr.mxu0 0.0
    %211 = vmatpush1.msra.mxu0 0.0
    %212 = vmatprep.subr.mxu0 0.0
    %213 = vmatpush1.msra.mxu0 0.0
    %214 = vmatprep.subr.mxu0 0.0
    %215 = vmatpush1.msra.mxu0 0.0
    %216 = vmatprep.subr.mxu0 0.0
    %217 = vmatpush1.msra.mxu0 0.0
    %218 = vmatprep.subr.mxu0 0.0
    %219 = vmatpush1.msra.mxu0 0.0
    %220 = vmatprep.subr.mxu0 0.0
    %221 = vmatpush1.msra.mxu0 0.0
    %222 = vmatprep.subr.mxu0 0.0
    %223 = vmatpush1.msra.mxu0 0.0
    %224 = vmatprep.subr.mxu0 0.0
    %225 = vmatpush1.msra.mxu0 0.0
    %226 = vmatprep.subr.mxu0 0.0
    %227 = vmatpush1.msra.mxu0 0.0
    %228 = vmatprep.subr.mxu0 0.0
    %229 = vmatpush1.msra.mxu0 0.0
    %230 = vmatprep.subr.mxu0 0.0
    %231 = vmatpush1.msra.mxu0 0.0
    %232 = vmatprep.subr.mxu0 0.0
    %233 = vmatpush1.msra.mxu0 0.0
    %234 = vmatprep.subr.mxu0 0.0
    %235 = vmatpush1.msra.mxu0 0.0
    %236 = vmatprep.subr.mxu0 0.0
    %237 = vmatpush1.msra.mxu0 0.0
    %238 = vmatprep.subr.mxu0 0.0
    %239 = vmatpush1.msra.mxu0 0.0
    %240 = vmatprep.subr.mxu0 0.0
    %241 = vmatpush1.msra.mxu0 0.0
    %242 = vmatprep.subr.mxu0 0.0
    %243 = vmatpush1.msra.mxu0 0.0
    %244 = vmatprep.subr.mxu0 0.0
    %245 = vmatpush1.msra.mxu0 0.0
    %246 = vmatprep.subr.mxu0 0.0
    %247 = vmatpush1.msra.mxu0 0.0
    %248 = vmatprep.subr.mxu0 0.0
    %249 = vmatpush1.msra.mxu0 0.0
    %250 = vmatprep.mubr.f32.mxu0 0.0
    %251 = vmatmul.mubr.f32.gmra.mrb[0].mxu0 %v184
    %v252 = vpop.f32.mrb[0].mxu0
    %v253 = vadd.f32 %v177, %v252
    %v254 = vpop.f32.mrb[0].mxu0
    %255 = vdwg.mxu0
    %v256 = vtanh.pop %v253
    %v257 = vsub.f32 0.0, %v253
    %v258 = vmul.f32 %v257, 1.442695
    %v259 = vpow.pop %v258
    %v260 = vadd.f32 %v259, 1.0
    %v261 = vrcp.pop %v260
    %v262 = vmul.f32 1.0, %v261
    %v263 = vsel %vm36, %v256, %v262
    %v264 = vrot.slane %v31, 3
    %265 = vrot.lane.b32.xlu0 %v264, 32
    %v266 = vpop.permute.xlu0 %265
    %v268 = vmul.f32 %v263, %v266
    %270 = vrot.lane.b32.xlu0 %v263, 64
    %v271 = vpop.permute.xlu0 %270
    %v273 = vmul.f32 %v263, %v271
    %275 = vrot.lane.b32.xlu0 %v273, 32
    %v276 = vpop.permute.xlu0 %275
    %v278 = vadd.f32 %v268, %v276
    %v279 = vtanh.pop %v278
    %281 = vrot.lane.b32.xlu0 %v279, 64
    %v282 = vpop.permute.xlu0 %281
    %v284 = vmul.f32 %v263, %v282
    %286 = vrot.lane.b32.xlu0 %v284, 32
    %v287 = vpop.permute.xlu0 %286
    %289 = vst.msk [vmem:[%s3 + $0x1] sm:$0x1] %vm162, %v287
    %291 = vrot.lane.b32.xlu0 %v278, 96
    %v292 = vpop.permute.xlu0 %291
    %294 = vst.msk [vmem:[%s3 + $0x3] sm:$0x1] %vm162, %v292
    %v295 = vmax.f32 %v284, 0.0
    %v296 = vld [vmem:[#allocation2 + $0x88] sm:$0xff]
    %v297 = vld [vmem:[#allocation2 + $0x90] sm:$0xff]
    %v298 = vld [vmem:[#allocation2 + $0x98] sm:$0xff]
    %v299 = vld [vmem:[#allocation2 + $0xa0] sm:$0xff]
    %v300 = vld [vmem:[#allocation2 + $0xa8] sm:$0x1]
    %302 = vrot.lane.b32.xlu0 %v295, 32
    %v303 = vpop.permute.xlu0 %302
    %v304 = vsel %vm53, %v303, 0
    %306 = vmatprep.subr.mxu0 0.0
    %307 = vmatpush1.msra.mxu0 %v296
    %308 = vmatprep.subr.mxu0 0.0
    %309 = vmatpush1.msra.mxu0 %v297
    %310 = vmatprep.subr.mxu0 0.0
    %311 = vmatpush1.msra.mxu0 %v298
    %312 = vmatprep.subr.mxu0 0.0
    %313 = vmatpush1.msra.mxu0 %v299
    %314 = vmatprep.subr.mxu0 0.0
    %315 = vmatpush1.msra.mxu0 0.0
    %316 = vmatprep.subr.mxu0 0.0
    %317 = vmatpush1.msra.mxu0 0.0
    %318 = vmatprep.subr.mxu0 0.0
    %319 = vmatpush1.msra.mxu0 0.0
    %320 = vmatprep.subr.mxu0 0.0
    %321 = vmatpush1.msra.mxu0 0.0
    %322 = vmatprep.subr.mxu0 0.0
    %323 = vmatpush1.msra.mxu0 0.0
    %324 = vmatprep.subr.mxu0 0.0
    %325 = vmatpush1.msra.mxu0 0.0
    %326 = vmatprep.subr.mxu0 0.0
    %327 = vmatpush1.msra.mxu0 0.0
    %328 = vmatprep.subr.mxu0 0.0
    %329 = vmatpush1.msra.mxu0 0.0
    %330 = vmatprep.subr.mxu0 0.0
    %331 = vmatpush1.msra.mxu0 0.0
    %332 = vmatprep.subr.mxu0 0.0
    %333 = vmatpush1.msra.mxu0 0.0
    %334 = vmatprep.subr.mxu0 0.0
    %335 = vmatpush1.msra.mxu0 0.0
    %336 = vmatprep.subr.mxu0 0.0
    %337 = vmatpush1.msra.mxu0 0.0
    %338 = vmatprep.subr.mxu0 0.0
    %339 = vmatpush1.msra.mxu0 0.0
    %340 = vmatprep.subr.mxu0 0.0
    %341 = vmatpush1.msra.mxu0 0.0
    %342 = vmatprep.subr.mxu0 0.0
    %343 = vmatpush1.msra.mxu0 0.0
    %344 = vmatprep.subr.mxu0 0.0
    %345 = vmatpush1.msra.mxu0 0.0
    %346 = vmatprep.subr.mxu0 0.0
    %347 = vmatpush1.msra.mxu0 0.0
    %348 = vmatprep.subr.mxu0 0.0
    %349 = vmatpush1.msra.mxu0 0.0
    %350 = vmatprep.subr.mxu0 0.0
    %351 = vmatpush1.msra.mxu0 0.0
    %352 = vmatprep.subr.mxu0 0.0
    %353 = vmatpush1.msra.mxu0 0.0
    %354 = vmatprep.subr.mxu0 0.0
    %355 = vmatpush1.msra.mxu0 0.0
    %356 = vmatprep.subr.mxu0 0.0
    %357 = vmatpush1.msra.mxu0 0.0
    %358 = vmatprep.subr.mxu0 0.0
    %359 = vmatpush1.msra.mxu0 0.0
    %360 = vmatprep.subr.mxu0 0.0
    %361 = vmatpush1.msra.mxu0 0.0
    %362 = vmatprep.subr.mxu0 0.0
    %363 = vmatpush1.msra.mxu0 0.0
    %364 = vmatprep.subr.mxu0 0.0
    %365 = vmatpush1.msra.mxu0 0.0
    %366 = vmatprep.subr.mxu0 0.0
    %367 = vmatpush1.msra.mxu0 0.0
    %368 = vmatprep.subr.mxu0 0.0
    %369 = vmatpush1.msra.mxu0 0.0
    %370 = vmatprep.mubr.f32.mxu0 0.0
    %371 = vmatmul.mubr.f32.gmra.mrb[0].mxu0 %v304
    %v372 = vpop.f32.mrb[0].mxu0
    %v373 = vadd.f32 %v300, %v372
    %v374 = vpop.f32.mrb[0].mxu0
    %375 = vdwg.mxu0
    %v376 = vmax.f32 %v373, 0.0
    %v377 = vsel %vm39, %v376, %v373
    %v378 = vld [vmem:[#allocation2 + $0xb0] sm:$0xff]
    %v379 = vld [vmem:[#allocation2 + $0xb8] sm:$0xff]
    %v380 = vld [vmem:[#allocation2 + $0xc0] sm:$0xff]
    %v381 = vld [vmem:[#allocation2 + $0xc8] sm:$0xff]
    %v382 = vld [vmem:[#allocation2 + $0xd0] sm:$0xff]
    %v383 = vld [vmem:[#allocation2 + $0xd8] sm:$0xff]
    %v384 = vld [vmem:[#allocation2 + $0xe0] sm:$0xff]
    %v385 = vld [vmem:[#allocation2 + $0xe8] sm:$0xff]
    %v386 = vld [vmem:[#allocation2 + $0xf0] sm:$0xff]
    %v387 = vld [vmem:[#allocation2 + $0xf8] sm:$0xff]
    %v388 = vld [vmem:[#allocation2 + $0x100] sm:$0xff]
    %v389 = vld [vmem:[#allocation2 + $0x108] sm:$0xff]
    %v390 = vld [vmem:[#allocation2 + $0x110] sm:$0xff]
    %v391 = vld [vmem:[#allocation2 + $0x118] sm:$0xff]
    %v392 = vld [vmem:[#allocation2 + $0x120] sm:$0xff]
    %v393 = vld [vmem:[#allocation2 + $0x128] sm:$0xff]
    %v394 = vld [vmem:[#allocation2 + $0x130] sm:$0x1]
    %395 = vmatprep.subr.mxu0 0.0
    %396 = vmatpush1.msra.mxu0 %v378
    %397 = vmatprep.subr.mxu0 0.0
    %398 = vmatpush1.msra.mxu0 %v379
    %399 = vmatprep.subr.mxu0 0.0
    %400 = vmatpush1.msra.mxu0 %v380
    %401 = vmatprep.subr.mxu0 0.0
    %402 = vmatpush1.msra.mxu0 %v381
    %403 = vmatprep.subr.mxu0 0.0
    %404 = vmatpush1.msra.mxu0 %v382
    %405 = vmatprep.subr.mxu0 0.0
    %406 = vmatpush1.msra.mxu0 %v383
    %407 = vmatprep.subr.mxu0 0.0
    %408 = vmatpush1.msra.mxu0 %v384
    %409 = vmatprep.subr.mxu0 0.0
    %410 = vmatpush1.msra.mxu0 %v385
    %411 = vmatprep.subr.mxu0 0.0
    %412 = vmatpush1.msra.mxu0 %v386
    %413 = vmatprep.subr.mxu0 0.0
    %414 = vmatpush1.msra.mxu0 %v387
    %415 = vmatprep.subr.mxu0 0.0
    %416 = vmatpush1.msra.mxu0 %v388
    %417 = vmatprep.subr.mxu0 0.0
    %418 = vmatpush1.msra.mxu0 %v389
    %419 = vmatprep.subr.mxu0 0.0
    %420 = vmatpush1.msra.mxu0 %v390
    %421 = vmatprep.subr.mxu0 0.0
    %422 = vmatpush1.msra.mxu0 %v391
    %423 = vmatprep.subr.mxu0 0.0
    %424 = vmatpush1.msra.mxu0 %v392
    %425 = vmatprep.subr.mxu0 0.0
    %426 = vmatpush1.msra.mxu0 %v393
    %427 = vmatprep.subr.mxu0 0.0
    %428 = vmatpush1.msra.mxu0 0.0
    %429 = vmatprep.subr.mxu0 0.0
    %430 = vmatpush1.msra.mxu0 0.0
    %431 = vmatprep.subr.mxu0 0.0
    %432 = vmatpush1.msra.mxu0 0.0
    %433 = vmatprep.subr.mxu0 0.0
    %434 = vmatpush1.msra.mxu0 0.0
    %435 = vmatprep.subr.mxu0 0.0
    %436 = vmatpush1.msra.mxu0 0.0
    %437 = vmatprep.subr.mxu0 0.0
    %438 = vmatpush1.msra.mxu0 0.0
    %439 = vmatprep.subr.mxu0 0.0
    %440 = vmatpush1.msra.mxu0 0.0
    %441 = vmatprep.subr.mxu0 0.0
    %442 = vmatpush1.msra.mxu0 0.0
    %443 = vmatprep.subr.mxu0 0.0
    %444 = vmatpush1.msra.mxu0 0.0
    %445 = vmatprep.subr.mxu0 0.0
    %446 = vmatpush1.msra.mxu0 0.0
    %447 = vmatprep.subr.mxu0 0.0
    %448 = vmatpush1.msra.mxu0 0.0
    %449 = vmatprep.subr.mxu0 0.0
    %450 = vmatpush1.msra.mxu0 0.0
    %451 = vmatprep.subr.mxu0 0.0
    %452 = vmatpush1.msra.mxu0 0.0
    %453 = vmatprep.subr.mxu0 0.0
    %454 = vmatpush1.msra.mxu0 0.0
    %455 = vmatprep.subr.mxu0 0.0
    %456 = vmatpush1.msra.mxu0 0.0
    %457 = vmatprep.subr.mxu0 0.0
    %458 = vmatpush1.msra.mxu0 0.0
    %459 = vmatprep.mubr.f32.mxu0 0.0
    %460 = vmatmul.mubr.f32.gmra.mrb[0].mxu0 %v377
    %v461 = vpop.f32.mrb[0].mxu0
    %v462 = vadd.f32 %v394, %v461
    %v463 = vpop.f32.mrb[0].mxu0
    %464 = vdwg.mxu0
    %v465 = vmax.f32 %v462, 0.0
    %466 = vst [vmem:[%s4] sm:$0x1] %v465
    // Predicated region
    $region18: #{forward.1} parent=1 // pred_check
      _
    $region19: #{forward.1} parent=1 // pred_check_branch
      %468 = sbr.rel (0) target = $region21
    $region20: #{forward.1} parent=1 // pred_region
      _
    $region21: #{forward.1} parent=1 // pred_fallthru
      _
    // Predicated region
    $region22: #{forward.1} parent=1 // pred_check
      _
    $region23: #{forward.1} parent=1 // pred_check_branch
      %470 = sbr.rel (0) target = $region25
    $region24: #{forward.1} parent=1 // pred_region
      _
    $region25: #{forward.1} parent=1 // pred_fallthru
      _
    // Predicated region
    $region26: #{forward.1} parent=1 // pred_check
      _
    $region27: #{forward.1} parent=1 // pred_check_branch
      %472 = sbr.rel (0) target = $region29
    $region28: #{forward.1} parent=1 // pred_region
      _
    $region29: #{forward.1} parent=1 // pred_fallthru
      _
    // Predicated region
    $region30: #{forward.1} parent=1 // pred_check
      _
    $region31: #{forward.1} parent=1 // pred_check_branch
      %474 = sbr.rel (0) target = $region33
    $region32: #{forward.1} parent=1 // pred_region
      _
    $region33: #{forward.1} parent=1 // pred_fallthru
      _
    %475 = vsyncpa [#allocation3], 1

</llo_original>
